<compile_context>
chip_gen: v7x
topology: tpu7x:2x2x1
jax: 0.10.0
libtpu: 0.0.40
codegen_flags: <defaults>
</compile_context>

<pallas_src>
import functools

import jax
import jax.numpy as jnp
from jax.experimental import pallas as pl
from jax.experimental.pallas import tpu as pltpu

_EPS = 1e-5
_TINY_BYTES = 16 * 1024              # below this: plain jnp fallback
_TILE_TARGET_BYTES = 4 * 1024 * 1024  # target per-tile footprint (streamed)


# ---------------------------------------------------------------------------
# Kernels
# ---------------------------------------------------------------------------

def _stats_kernel(x_ref, sum_ref, sumsq_ref, *, tile, tiles_per_chunk,
                  rows_valid, needs_mask):
    """Phase 1: accumulate per-lane sum / sum-of-squares over row tiles.

    Grid is (n_chunks, tiles_per_chunk); chunk axis is 'parallel' (megacore),
    tile axis is the serial reduction.  Tail / duplicate blocks are masked by
    comparing the *unclamped* global row index against rows_valid.
    """
    c = pl.program_id(0)
    i = pl.program_id(1)

    @pl.when(i == 0)
    def _init():
        sum_ref[...] = jnp.zeros_like(sum_ref)
        sumsq_ref[...] = jnp.zeros_like(sumsq_ref)

    x = x_ref[...].astype(jnp.float32)
    if needs_mask:
        row0 = (c * tiles_per_chunk + i) * tile
        rid = row0 + jax.lax.broadcasted_iota(jnp.int32, x.shape, 0)
        x = jnp.where(rid < rows_valid, x, 0.0)
    sum_ref[...] += jnp.sum(x, axis=0, keepdims=True)[None]
    sumsq_ref[...] += jnp.sum(x * x, axis=0, keepdims=True)[None]


def _normalize_kernel(x_ref, scale_ref, shift_ref, o_ref):
    """Phase 2: y = x * scale + shift (affine folded into scale/shift)."""
    x = x_ref[...].astype(jnp.float32)
    o_ref[...] = (x * scale_ref[...] + shift_ref[...]).astype(o_ref.dtype)


def _resident_kernel(x_ref, gamma_ref, beta_ref, o_ref, *, k, n_valid):
    """Fused single-block path: stats + normalize with one HBM read of x.

    x_ref is lane-packed: lane position g*H + c holds (row group g, channel c),
    so per-channel totals fold the k lane groups with pltpu.roll (XLU; cheap
    next to the VPU work).  Output is computed from the centered tensor so the
    full-size fp32 copy of x dies before the epilogue.
    """
    x = x_ref[...].astype(jnp.float32)
    rows, w = x.shape
    h = w // k
    inv_n = 1.0 / float(n_valid)

    psum = jnp.sum(x, axis=0, keepdims=True)             # (1, W) group sums
    tot = psum
    for j in range(1, k):                                 # fold lane groups
        tot = tot + pltpu.roll(psum, shift=j * h, axis=1)
    mean = tot * inv_n                                    # full per-channel mean

    xc = x - mean                                         # centered (2-pass var)
    psq = jnp.sum(xc * xc, axis=0, keepdims=True)
    totq = psq
    for j in range(1, k):
        totq = totq + pltpu.roll(psq, shift=j * h, axis=1)
    var = totq * inv_n                                    # biased variance

    inv_std = jax.lax.rsqrt(var + _EPS)
    scale = gamma_ref[...].astype(jnp.float32) * inv_std
    o_ref[...] = (xc * scale + beta_ref[...].astype(jnp.float32)).astype(o_ref.dtype)


# ---------------------------------------------------------------------------
# Wrapper helpers
# ---------------------------------------------------------------------------

def _vmem_capacity_bytes():
    try:
        cap = getattr(pltpu.get_tpu_info(), "vmem_capacity_bytes", None)
        if cap:
            return int(cap)
    except Exception:
        pass
    return 64 * 1024 * 1024  # conservative default (v7x per-TC VMEM)


def _choose_packing(R, H):
    """Smallest k <= 16 with lane-dense width (k*H % 128 == 0) and R % k == 0."""
    if H % 128 == 0:
        return 1
    for k in range(2, 17):
        if (k * H) % 128 == 0 and R % k == 0:
            return k
    return 1  # masked stores fallback


def _choose_row_tile(n_rows, row_bytes, target_bytes):
    """Row tile (multiple of 8) sized to ~target_bytes.

    Prefers an exact divisor of n_rows, but rejects degenerate divisors below
    half the byte-budget (which would explode the grid-step count); otherwise
    falls through to a cdiv grid whose tail rows are masked in-kernel.
    """
    if n_rows <= 8:
        return max(n_rows, 1)
    cap = max(8, (target_bytes // max(row_bytes, 1)) // 8 * 8)
    upper = min(cap, (n_rows // 8) * 8)
    if upper < 8:
        return n_rows
    lo = max(8, (upper // 2) // 8 * 8)
    for t in range(upper, lo - 1, -8):
        if n_rows % t == 0:
            return t            # exact grid, no tail masking
    return upper                # cdiv grid, masked tail


def _streamed_path(x2, gamma, beta, n_samples, hidden, k, *,
                   tile_bytes, vmem_cap, donate_x):
    """Two pallas_calls: streaming stats reduction, then parallel normalize."""
    rows, w = x2.shape
    itemsize = x2.dtype.itemsize
    tile = _choose_row_tile(rows, w * itemsize, tile_bytes)
    total_blocks = pl.cdiv(rows, tile)
    n_chunks = 2 if total_blocks >= 4 else 1      # 2 TCs on v7x; harmless on 1-TC
    tpc = pl.cdiv(total_blocks, n_chunks)         # tiles per chunk
    last_block = total_blocks - 1
    needs_mask = (rows % tile != 0) or (n_chunks * tpc != total_blocks)

    tile_b = tile * w * itemsize
    vmem_limit = int(min(vmem_cap * 3 // 4,
                         max(16 << 20, 6 * tile_b + (8 << 20))))

    def x_stats_index(c, i):
        # Clamp so extra steps of the second chunk re-read the last valid block
        # (their contribution is zeroed by the unclamped-row mask in-kernel).
        return (jnp.minimum(c * tpc + i, last_block), 0)

    sums, sumsqs = pl.pallas_call(
        functools.partial(_stats_kernel, tile=tile, tiles_per_chunk=tpc,
                          rows_valid=rows, needs_mask=needs_mask),
        out_shape=(
            jax.ShapeDtypeStruct((n_chunks, 1, w), jnp.float32),
            jax.ShapeDtypeStruct((n_chunks, 1, w), jnp.float32),
        ),
        grid=(n_chunks, tpc),
        in_specs=[pl.BlockSpec((tile, w), x_stats_index)],
        out_specs=(
            pl.BlockSpec((1, 1, w), lambda c, i: (c, 0, 0)),
            pl.BlockSpec((1, 1, w), lambda c, i: (c, 0, 0)),
        ),
        compiler_params=pltpu.CompilerParams(
            dimension_semantics=("parallel", "arbitrary"),
            vmem_limit_bytes=vmem_limit),
        cost_estimate=pl.CostEstimate(
            flops=3 * rows * w, transcendentals=0,
            bytes_accessed=rows * w * itemsize + 2 * n_chunks * w * 4),
    )(x2)

    # Tiny per-channel epilogue in plain jnp: fold chunks + lane groups, fold
    # the affine into scale/shift.
    inv_n = 1.0 / float(n_samples)
    sum_w = jnp.sum(sums, axis=(0, 1))       # (w,)
    sq_w = jnp.sum(sumsqs, axis=(0, 1))
    if k > 1:
        sum_h = jnp.sum(sum_w.reshape(k, hidden), axis=0)
        sq_h = jnp.sum(sq_w.reshape(k, hidden), axis=0)
    else:
        sum_h, sq_h = sum_w, sq_w
    mean = sum_h * inv_n
    # TODO(synk): E[x^2]-mean^2 (fp32, clamped at 0) can cancel when
    # |mean| >> std; fine for BN activations, else add a centered second pass.
    var = jnp.maximum(sq_h * inv_n - mean * mean, 0.0)    # biased variance
    inv_std = jax.lax.rsqrt(var + _EPS)
    scale = gamma.astype(jnp.float32) * inv_std
    shift = beta.astype(jnp.float32) - mean * scale
    if k > 1:
        scale = jnp.tile(scale, k)
        shift = jnp.tile(shift, k)
    scale_w = scale.reshape(1, w)
    shift_w = shift.reshape(1, w)

    out = pl.pallas_call(
        _normalize_kernel,
        out_shape=jax.ShapeDtypeStruct((rows, w), x2.dtype),
        grid=(total_blocks,),
        in_specs=[
            pl.BlockSpec((tile, w), lambda i: (i, 0)),
            pl.BlockSpec((1, w), lambda i: (0, 0)),
            pl.BlockSpec((1, w), lambda i: (0, 0)),
        ],
        out_specs=pl.BlockSpec((tile, w), lambda i: (i, 0)),
        input_output_aliases=({0: 0} if donate_x else {}),
        compiler_params=pltpu.CompilerParams(
            dimension_semantics=("parallel",),   # independent tiles -> megacore
            vmem_limit_bytes=vmem_limit),
        cost_estimate=pl.CostEstimate(
            flops=2 * rows * w, transcendentals=0,
            bytes_accessed=2 * rows * w * itemsize + 2 * w * 4),
    )(x2, scale_w, shift_w)
    return out


def _resident_path(x2, gamma, beta, k, n_samples, vmem_cap):
    """Single fused kernel for mid-sized problems (one HBM read of x)."""
    rp, w = x2.shape
    gamma_f = gamma.astype(jnp.float32)
    beta_f = beta.astype(jnp.float32)
    if k > 1:
        gamma_f = jnp.tile(gamma_f, k)
        beta_f = jnp.tile(beta_f, k)
    gamma_w = gamma_f.reshape(1, w)
    beta_w = beta_f.reshape(1, w)

    in_bytes = rp * w * x2.dtype.itemsize
    vmem_limit = int(min(vmem_cap * 3 // 4,
                         max(32 << 20, 7 * in_bytes + (8 << 20))))

    return pl.pallas_call(
        functools.partial(_resident_kernel, k=k, n_valid=n_samples),
        out_shape=jax.ShapeDtypeStruct((rp, w), x2.dtype),
        grid=(1,),
        in_specs=[
            pl.BlockSpec((rp, w), lambda i: (0, 0)),
            pl.BlockSpec((1, w), lambda i: (0, 0)),
            pl.BlockSpec((1, w), lambda i: (0, 0)),
        ],
        out_specs=pl.BlockSpec((rp, w), lambda i: (0, 0)),
        compiler_params=pltpu.CompilerParams(
            dimension_semantics=("arbitrary",),
            vmem_limit_bytes=vmem_limit),
        cost_estimate=pl.CostEstimate(
            flops=7 * rp * w, transcendentals=w,
            bytes_accessed=2 * rp * w * x2.dtype.itemsize),
    )(x2, gamma_w, beta_w)


def _jnp_forward(x, gamma, beta):
    """Plain-XLA path for tiny problems (kernel launch overhead dominates)."""
    xf = x.astype(jnp.float32)
    mean = jnp.mean(xf, axis=(0, 1), keepdims=True)
    var = jnp.mean(jnp.square(xf - mean), axis=(0, 1), keepdims=True)
    y = (xf - mean) * jax.lax.rsqrt(var + _EPS) * gamma.astype(jnp.float32) \
        + beta.astype(jnp.float32)
    return y.astype(x.dtype)


# ---------------------------------------------------------------------------
# Public entry point (== BatchNormNode.forward)
# ---------------------------------------------------------------------------

def batch_norm_node(x: jax.Array, gamma: jax.Array, beta: jax.Array, *,
                    tiny_threshold_bytes: int = _TINY_BYTES,
                    resident_threshold_bytes: int | None = None,
                    stream_tile_bytes: int | None = None,
                    donate_x: bool = False) -> jax.Array:
    """x: (B, N, H). gamma, beta: (H,). Returns (B, N, H)."""
    B, N, H = x.shape
    R = B * N
    nbytes = R * H * x.dtype.itemsize

    if nbytes <= tiny_threshold_bytes:
        return _jnp_forward(x, gamma, beta)

    vmem_cap = _vmem_capacity_bytes()
    if resident_threshold_bytes is None:
        # Resident = 2x HBM traffic vs streamed 3x; take it whenever the whole
        # block fits comfortably: ~16 MiB on 128 MiB VMEM chips (v5e/v6e),
        # ~8 MiB on 64 MiB chips (v7x).
        resident_threshold_bytes = min(24 << 20, vmem_cap // 8)
    if stream_tile_bytes is None:
        stream_tile_bytes = _TILE_TARGET_BYTES

    # Lane-dense packing: (R, H) -> (R/k, k*H) so every store is 128-lane wide.
    k = _choose_packing(R, H)
    w = k * H
    rp = R // k
    x2 = x.reshape(rp, w)  # contiguous reshape: pure relabeling, no data move

    if nbytes <= resident_threshold_bytes:
        out2 = _resident_path(x2, gamma, beta, k, R, vmem_cap)
    else:
        out2 = _streamed_path(x2, gamma, beta, R, H, k,
                              tile_bytes=stream_tile_bytes,
                              vmem_cap=vmem_cap, donate_x=donate_x)
    return out2.reshape(B, N, H)


# ---------------------------------------------------------------------------
# Reference + self-test
# ---------------------------------------------------------------------------

def _reference(x, gamma, beta):
    xf = x.astype(jnp.float32)
    mean = jnp.mean(xf, axis=(0, 1), keepdims=True)
    var = jnp.mean((xf - mean) ** 2, axis=(0, 1), keepdims=True)
    y = (xf - mean) / jnp.sqrt(var + _EPS) * gamma + beta
    return y.astype(x.dtype)


if __name__ == "__main__":
    key = jax.random.PRNGKey(0)
    kx, kg, kb, kx2, kx3 = jax.random.split(key, 5)

    # Shape implied by the module: (batch, num_nodes, hidden_dim).
    B, N, H = 2, 256, 32
    x = jax.random.normal(kx, (B, N, H), dtype=jnp.float32)
    gamma = 1.0 + 0.1 * jax.random.normal(kg, (H,), dtype=jnp.float32)
    beta = 0.1 * jax.random.normal(kb, (H,), dtype=jnp.float32)
    ref = _reference(x, gamma, beta)

    # Default dispatch: fused resident kernel (lane-packed, k=4).
    out_res = batch_norm_node(x, gamma, beta)
    jax.block_until_ready(out_res)
    assert out_res.shape == (B, N, H)
    assert jnp.allclose(out_res, ref, atol=2e-4, rtol=2e-4)

    # Force the streamed two-phase path as well.
    out_str = batch_norm_node(x, gamma, beta, resident_threshold_bytes=0)
    jax.block_until_ready(out_str)
    assert jnp.allclose(out_str, ref, atol=2e-4, rtol=2e-4)

    # Hidden size that does not divide 128: generalized packing (k=8, w=384).
    B2, N2, H2 = 2, 64, 48
    x2 = jax.random.normal(kx2, (B2, N2, H2), dtype=jnp.float32)
    g2 = 1.0 + 0.05 * jax.random.normal(kg, (H2,), dtype=jnp.float32)
    b2 = 0.05 * jax.random.normal(kb, (H2,), dtype=jnp.float32)
    ref2 = _reference(x2, g2, b2)
    out2_res = batch_norm_node(x2, g2, b2)
    out2_str = batch_norm_node(x2, g2, b2, resident_threshold_bytes=0)
    jax.block_until_ready((out2_res, out2_str))
    assert jnp.allclose(out2_res, ref2, atol=2e-4, rtol=2e-4)
    assert jnp.allclose(out2_str, ref2, atol=2e-4, rtol=2e-4)

    # Medium shape forcing the streamed path with a cdiv (masked-tail) grid and
    # the 2-chunk stats split (exercises all in-kernel masking branches).
    B3, N3, H3 = 4, 999, 64
    x3 = jax.random.normal(kx3, (B3, N3, H3), dtype=jnp.float32)
    g3 = 1.0 + 0.05 * jax.random.normal(kg, (H3,), dtype=jnp.float32)
    b3 = 0.05 * jax.random.normal(kb, (H3,), dtype=jnp.float32)
    ref3 = _reference(x3, g3, b3)
    out3 = batch_norm_node(x3, g3, b3, resident_threshold_bytes=0,
                           stream_tile_bytes=64 * 1024)
    jax.block_until_ready(out3)
    assert jnp.allclose(out3, ref3, atol=2e-4, rtol=2e-4)

    print("KERNEL_OK")
</pallas_src>

<mosaic_0001>
module attributes {stable_mosaic.version = 11 : i64} {
  func.func @_resident_kernel(%arg0: i32, %arg1: memref<128x128xf32, #tpu.memory_space<vmem>>, %arg2: memref<1x128xf32, #tpu.memory_space<vmem>>, %arg3: memref<1x128xf32, #tpu.memory_space<vmem>>, %arg4: memref<128x128xf32, #tpu.memory_space<vmem>>) attributes {dimension_semantics = [#tpu.dimension_semantics<arbitrary>], iteration_bounds = array<i64: 1>, scalar_prefetch = 0 : i64, scratch_operands = 0 : i64, tpu.core_type = #tpu.core_type<tc>, window_params = [{pipeline_mode = #tpu.pipeline_mode<synchronous>, transform_indices = @transform_0, window_bounds = array<i64: 128, 128>}, {pipeline_mode = #tpu.pipeline_mode<synchronous>, transform_indices = @transform_1, window_bounds = array<i64: 1, 128>}, {pipeline_mode = #tpu.pipeline_mode<synchronous>, transform_indices = @transform_2, window_bounds = array<i64: 1, 128>}, {pipeline_mode = #tpu.pipeline_mode<synchronous>, transform_indices = @transform_3, window_bounds = array<i64: 128, 128>}]} {
    %c0 = arith.constant 0 : index
    %c0_0 = arith.constant 0 : index
    %0 = vector.load %arg1[%c0, %c0_0] : memref<128x128xf32, #tpu.memory_space<vmem>>, vector<128x128xf32>
    %cst = arith.constant dense<0.000000e+00> : vector<128xf32>
    %1 = vector.multi_reduction <add>, %0, %cst [0] : vector<128x128xf32> to vector<128xf32>
    %2 = vector.shape_cast %1 : vector<128xf32> to vector<1x128xf32>
    %c32_i32 = arith.constant 32 : i32
    %3 = tpu.dynamic_rotate %2 by %c32_i32 dim 1 : vector<1x128xf32>, i32 -> vector<1x128xf32>
    %4 = arith.addf %2, %3 : vector<1x128xf32>
    %c64_i32 = arith.constant 64 : i32
    %5 = tpu.dynamic_rotate %2 by %c64_i32 dim 1 : vector<1x128xf32>, i32 -> vector<1x128xf32>
    %6 = arith.addf %4, %5 : vector<1x128xf32>
    %c96_i32 = arith.constant 96 : i32
    %7 = tpu.dynamic_rotate %2 by %c96_i32 dim 1 : vector<1x128xf32>, i32 -> vector<1x128xf32>
    %8 = arith.addf %6, %7 : vector<1x128xf32>
    %cst_1 = arith.constant 0.001953125 : f32
    %9 = vector.broadcast %cst_1 : f32 to vector<1x128xf32>
    %10 = arith.mulf %8, %9 : vector<1x128xf32>
    %11 = vector.broadcast %10 : vector<1x128xf32> to vector<128x128xf32>
    %12 = arith.subf %0, %11 : vector<128x128xf32>
    %13 = arith.mulf %12, %12 : vector<128x128xf32>
    %cst_2 = arith.constant dense<0.000000e+00> : vector<128xf32>
    %14 = vector.multi_reduction <add>, %13, %cst_2 [0] : vector<128x128xf32> to vector<128xf32>
    %15 = vector.shape_cast %14 : vector<128xf32> to vector<1x128xf32>
    %c32_i32_3 = arith.constant 32 : i32
    %16 = tpu.dynamic_rotate %15 by %c32_i32_3 dim 1 : vector<1x128xf32>, i32 -> vector<1x128xf32>
    %17 = arith.addf %15, %16 : vector<1x128xf32>
    %c64_i32_4 = arith.constant 64 : i32
    %18 = tpu.dynamic_rotate %15 by %c64_i32_4 dim 1 : vector<1x128xf32>, i32 -> vector<1x128xf32>
    %19 = arith.addf %17, %18 : vector<1x128xf32>
    %c96_i32_5 = arith.constant 96 : i32
    %20 = tpu.dynamic_rotate %15 by %c96_i32_5 dim 1 : vector<1x128xf32>, i32 -> vector<1x128xf32>
    %21 = arith.addf %19, %20 : vector<1x128xf32>
    %cst_6 = arith.constant 0.001953125 : f32
    %22 = vector.broadcast %cst_6 : f32 to vector<1x128xf32>
    %23 = arith.mulf %21, %22 : vector<1x128xf32>
    %cst_7 = arith.constant 9.99999974E-6 : f32
    %24 = vector.broadcast %cst_7 : f32 to vector<1x128xf32>
    %25 = arith.addf %23, %24 : vector<1x128xf32>
    %26 = math.rsqrt %25 : vector<1x128xf32>
    %c0_8 = arith.constant 0 : index
    %c0_9 = arith.constant 0 : index
    %27 = vector.load %arg2[%c0_8, %c0_9] : memref<1x128xf32, #tpu.memory_space<vmem>>, vector<1x128xf32>
    %28 = arith.mulf %27, %26 : vector<1x128xf32>
    %29 = vector.broadcast %28 : vector<1x128xf32> to vector<128x128xf32>
    %30 = arith.mulf %12, %29 : vector<128x128xf32>
    %c0_10 = arith.constant 0 : index
    %c0_11 = arith.constant 0 : index
    %31 = vector.load %arg3[%c0_10, %c0_11] : memref<1x128xf32, #tpu.memory_space<vmem>>, vector<1x128xf32>
    %32 = vector.broadcast %31 : vector<1x128xf32> to vector<128x128xf32>
    %33 = arith.addf %30, %32 : vector<128x128xf32>
    %c0_12 = arith.constant 0 : index
    %c0_13 = arith.constant 0 : index
    %34 = vector.load %arg4[%c0_12, %c0_13] : memref<128x128xf32, #tpu.memory_space<vmem>>, vector<128x128xf32>
    tpu.vector_store %arg4[%c0_12, %c0_13], %33 {strides = array<i32>} : memref<128x128xf32, #tpu.memory_space<vmem>>, vector<128x128xf32>,
    return
  }
  func.func @transform_0(%arg0: i32) -> (i32, i32) {
    %c0_i32 = arith.constant 0 : i32
    %c0_i32_0 = arith.constant 0 : i32
    %c0_i32_1 = arith.constant 0 : i32
    return %c0_i32, %c0_i32_0 : i32, i32
  }
  func.func @transform_1(%arg0: i32) -> (i32, i32) {
    %c0_i32 = arith.constant 0 : i32
    %c0_i32_0 = arith.constant 0 : i32
    %c0_i32_1 = arith.constant 0 : i32
    return %c0_i32, %c0_i32_0 : i32, i32
  }
  func.func @transform_2(%arg0: i32) -> (i32, i32) {
    %c0_i32 = arith.constant 0 : i32
    %c0_i32_0 = arith.constant 0 : i32
    %c0_i32_1 = arith.constant 0 : i32
    return %c0_i32, %c0_i32_0 : i32, i32
  }
  func.func @transform_3(%arg0: i32) -> (i32, i32) {
    %c0_i32 = arith.constant 0 : i32
    %c0_i32_0 = arith.constant 0 : i32
    %c0_i32_1 = arith.constant 0 : i32
    return %c0_i32, %c0_i32_0 : i32, i32
  }
}

</mosaic_0001>

<llo_original>
// kernel: tpu_custom_call.1
$region0: #{tpu_custom_call.1}
  #allocation0 [shape = 'u32[]', space=smem, size = 0x4, offset = 0x4, fixed_abs, tag = 'smem constant byte address 0x4 - core index']
  #allocation1 [shape = 'u32[144,128]{1,0:T(1,128)}', space=vmem, size = 0x12000, scoped, tag = 'internal scratch']
  %s0 = inlined_call_operand.hbm [shape: f32[128,128], index: 0, kind: input, shape index: {}]
  %s1 = inlined_call_operand.vmem [shape: f32[1,128], index: 1, kind: input, shape index: {}]
  %s2 = inlined_call_operand.vmem [shape: f32[1,128], index: 2, kind: input, shape index: {}]
  %s3 = inlined_call_operand.hbm [shape: f32[128,128], index: 3, kind: output, shape index: {}]
  %s4 = sld [smem:[#allocation0]]
  $region26: #{tpu_custom_call.1} parent=0
    _
  %s6 = ssub.s32 1, %s4
  %s7 = scalar_select 0, %s6, %s4
  $region1: #{tpu_custom_call.1} parent=0
    #allocation2 [shape = 'u8[65536]{0}', space=vmem, size = 0x10000, scoped, tag = 'input window, operand 0, single buffered']
    #allocation3 [shape = 's32[1]{0}', space=sflag, size = 0x4, scoped, tag = 'scoped memory for tpu_custom_call.1']
    #allocation4 [shape = 's32[1]{0}', space=sflag, size = 0x4, scoped, tag = 'scoped memory for tpu_custom_call.1']
    #allocation5 [shape = 'u8[65536]{0}', space=vmem, size = 0x10000, scoped, tag = 'output window, operand 0, single buffered']
    %8 = vsyncpa [#allocation3], 0
    %9 = vsyncpa [#allocation4], 0
    // Predicated region
    $region2: #{tpu_custom_call.1} parent=1 // pred_check
      _
    $region3: #{tpu_custom_call.1} parent=1 // pred_check_branch
      %11 = sbr.rel (0) target = $region5
    $region4: #{tpu_custom_call.1} parent=1 // pred_region
      %s13 = ssub.s32 2048, 2048
      %14 = vsyncadd [#allocation3], %s13
      %s15 = sshll.u32 [#allocation2], 4
      %s16 = int_to_ptr.vmem [resolvable:$true] %s15
      %21 = dma.hbm_to_vmem [thread:$0]  %s0, 2048, %s16, [#allocation3], 128, 128, 8
    $region5: #{tpu_custom_call.1} parent=1 // pred_fallthru
      _
    // Predicated region
    $region6: #{tpu_custom_call.1} parent=1 // pred_check
      _
    $region7: #{tpu_custom_call.1} parent=1 // pred_check_branch
      %23 = sbr.rel (0) target = $region9
    $region8: #{tpu_custom_call.1} parent=1 // pred_region
      _
    $region9: #{tpu_custom_call.1} parent=1 // pred_fallthru
      _
    // Predicated region
    $region10: #{tpu_custom_call.1} parent=1 // pred_check
      _
    $region11: #{tpu_custom_call.1} parent=1 // pred_check_branch
      %25 = sbr.rel (0) target = $region13
    $region12: #{tpu_custom_call.1} parent=1 // pred_region
      _
    $region13: #{tpu_custom_call.1} parent=1 // pred_fallthru
      _
    // Predicated region
    $region14: #{tpu_custom_call.1} parent=1 // pred_check
      _
    $region15: #{tpu_custom_call.1} parent=1 // pred_check_branch
      %27 = sbr.rel (0) target = $region17
    $region16: #{tpu_custom_call.1} parent=1 // pred_region
      %28 = dma.done [#allocation3], 2048
    $region17: #{tpu_custom_call.1} parent=1 // pred_fallthru
      _
    %v29 = vld [vmem:[#allocation2] sm:$0xff]
    %v30 = vld [vmem:[#allocation2 + $0x8] sm:$0xff]
    %v31 = vld [vmem:[#allocation2 + $0x10] sm:$0xff]
    %v32 = vld [vmem:[#allocation2 + $0x18] sm:$0xff]
    %v33 = vld [vmem:[#allocation2 + $0x20] sm:$0xff]
    %v34 = vld [vmem:[#allocation2 + $0x28] sm:$0xff]
    %v35 = vld [vmem:[#allocation2 + $0x30] sm:$0xff]
    %v36 = vld [vmem:[#allocation2 + $0x38] sm:$0xff]
    %v37 = vld [vmem:[#allocation2 + $0x40] sm:$0xff]
    %v38 = vld [vmem:[#allocation2 + $0x48] sm:$0xff]
    %v39 = vld [vmem:[#allocation2 + $0x50] sm:$0xff]
    %v40 = vld [vmem:[#allocation2 + $0x58] sm:$0xff]
    %v41 = vld [vmem:[#allocation2 + $0x60] sm:$0xff]
    %v42 = vld [vmem:[#allocation2 + $0x68] sm:$0xff]
    %v43 = vld [vmem:[#allocation2 + $0x70] sm:$0xff]
    %v44 = vld [vmem:[#allocation2 + $0x78] sm:$0xff]
    %v45 = vadd.f32 %v29, %v30
    %v46 = vadd.f32 %v45, %v31
    %v47 = vadd.f32 %v46, %v32
    %v48 = vadd.f32 %v47, %v33
    %v49 = vadd.f32 %v48, %v34
    %v50 = vadd.f32 %v49, %v35
    %v51 = vadd.f32 %v50, %v36
    %v52 = vadd.f32 %v51, %v37
    %v53 = vadd.f32 %v52, %v38
    %v54 = vadd.f32 %v53, %v39
    %v55 = vadd.f32 %v54, %v40
    %v56 = vadd.f32 %v55, %v41
    %v57 = vadd.f32 %v56, %v42
    %v58 = vadd.f32 %v57, %v43
    %v59 = vadd.f32 %v58, %v44
    %v60 = vrot.slane %v59, 4
    %v61 = vadd.f32 %v59, %v60
    %v62 = vrot.slane %v61, 2
    %v63 = vadd.f32 %v61, %v62
    %v64 = vrot.slane %v63, 1
    %v65 = vadd.f32 %v63, %v64
    %66 = vrot.lane.b32.xlu0 %v65, 32
    %v67 = vpop.permute.xlu0 %66
    %v68 = vadd.f32 %v65, %v67
    %69 = vrot.lane.b32.xlu0 %v65, 64
    %v70 = vpop.permute.xlu0 %69
    %v71 = vadd.f32 %v68, %v70
    %72 = vrot.lane.b32.xlu0 %v65, 96
    %v73 = vpop.permute.xlu0 %72
    %v74 = vadd.f32 %v71, %v73
    %v75 = vmul.f32 %v74, 0.001953125
    %v76 = vlaneseq
    %v77 = vshrl.u32 %v76, 7
    %v78 = vsub.s32 0, %v77
    %v79 = vrot.slane %v75, %v78
    %v80 = vsub.f32 %v29, %v79
    %v81 = vsub.f32 %v30, %v79
    %v82 = vsub.f32 %v31, %v79
    %v83 = vsub.f32 %v32, %v79
    %v84 = vsub.f32 %v33, %v79
    %v85 = vsub.f32 %v34, %v79
    %v86 = vsub.f32 %v35, %v79
    %v87 = vsub.f32 %v36, %v79
    %v88 = vsub.f32 %v37, %v79
    %v89 = vsub.f32 %v38, %v79
    %v90 = vsub.f32 %v39, %v79
    %v91 = vsub.f32 %v40, %v79
    %v92 = vsub.f32 %v41, %v79
    %v93 = vsub.f32 %v42, %v79
    %v94 = vsub.f32 %v43, %v79
    %v95 = vsub.f32 %v44, %v79
    %v96 = vmul.f32 %v80, %v80
    %v97 = vmul.f32 %v81, %v81
    %v98 = vmul.f32 %v82, %v82
    %v99 = vmul.f32 %v83, %v83
    %v100 = vmul.f32 %v84, %v84
    %v101 = vmul.f32 %v85, %v85
    %v102 = vmul.f32 %v86, %v86
    %v103 = vmul.f32 %v87, %v87
    %v104 = vmul.f32 %v88, %v88
    %v105 = vmul.f32 %v89, %v89
    %v106 = vmul.f32 %v90, %v90
    %v107 = vmul.f32 %v91, %v91
    %v108 = vmul.f32 %v92, %v92
    %v109 = vmul.f32 %v93, %v93
    %v110 = vmul.f32 %v94, %v94
    %v111 = vmul.f32 %v95, %v95
    %v112 = vadd.f32 %v96, %v97
    %v113 = vadd.f32 %v112, %v98
    %v114 = vadd.f32 %v113, %v99
    %v115 = vadd.f32 %v114, %v100
    %v116 = vadd.f32 %v115, %v101
    %v117 = vadd.f32 %v116, %v102
    %v118 = vadd.f32 %v117, %v103
    %v119 = vadd.f32 %v118, %v104
    %v120 = vadd.f32 %v119, %v105
    %v121 = vadd.f32 %v120, %v106
    %v122 = vadd.f32 %v121, %v107
    %v123 = vadd.f32 %v122, %v108
    %v124 = vadd.f32 %v123, %v109
    %v125 = vadd.f32 %v124, %v110
    %v126 = vadd.f32 %v125, %v111
    %v127 = vrot.slane %v126, 4
    %v128 = vadd.f32 %v126, %v127
    %v129 = vrot.slane %v128, 2
    %v130 = vadd.f32 %v128, %v129
    %v131 = vrot.slane %v130, 1
    %v132 = vadd.f32 %v130, %v131
    %133 = vrot.lane.b32.xlu0 %v132, 32
    %v134 = vpop.permute.xlu0 %133
    %v135 = vadd.f32 %v132, %v134
    %136 = vrot.lane.b32.xlu0 %v132, 64
    %v137 = vpop.permute.xlu0 %136
    %v138 = vadd.f32 %v135, %v137
    %139 = vrot.lane.b32.xlu0 %v132, 96
    %v140 = vpop.permute.xlu0 %139
    %v141 = vadd.f32 %v138, %v140
    %v142 = vmul.f32 %v141, 0.001953125
    %v143 = vadd.f32 %v142, 1e-05
    %v144 = vrsqrt.pop %v143
    %v145 = vld [vmem:[%s1] sm:$0x1]
    %v146 = vmul.f32 %v145, %v144
    %v148 = vlaneseq
    %v149 = vshrl.u32 %v148, 7
    %v150 = vsub.s32 0, %v149
    %v151 = vrot.slane %v146, %v150
    %v153 = vmul.f32 %v80, %v151
    %v154 = vmul.f32 %v81, %v151
    %v155 = vmul.f32 %v82, %v151
    %v156 = vmul.f32 %v83, %v151
    %v157 = vmul.f32 %v84, %v151
    %v158 = vmul.f32 %v85, %v151
    %v159 = vmul.f32 %v86, %v151
    %v160 = vmul.f32 %v87, %v151
    %v161 = vmul.f32 %v88, %v151
    %v162 = vmul.f32 %v89, %v151
    %v163 = vmul.f32 %v90, %v151
    %v164 = vmul.f32 %v91, %v151
    %v165 = vmul.f32 %v92, %v151
    %v166 = vmul.f32 %v93, %v151
    %v167 = vmul.f32 %v94, %v151
    %v168 = vmul.f32 %v95, %v151
    %v169 = vld [vmem:[%s2] sm:$0x1]
    %v171 = vlaneseq
    %v172 = vshrl.u32 %v171, 7
    %v173 = vsub.s32 0, %v172
    %v174 = vrot.slane %v169, %v173
    %v176 = vadd.f32 %v153, %v174
    %v177 = vadd.f32 %v154, %v174
    %v178 = vadd.f32 %v155, %v174
    %v179 = vadd.f32 %v156, %v174
    %v180 = vadd.f32 %v157, %v174
    %v181 = vadd.f32 %v158, %v174
    %v182 = vadd.f32 %v159, %v174
    %v183 = vadd.f32 %v160, %v174
    %v184 = vadd.f32 %v161, %v174
    %v185 = vadd.f32 %v162, %v174
    %v186 = vadd.f32 %v163, %v174
    %v187 = vadd.f32 %v164, %v174
    %v188 = vadd.f32 %v165, %v174
    %v189 = vadd.f32 %v166, %v174
    %v190 = vadd.f32 %v167, %v174
    %v191 = vadd.f32 %v168, %v174
    %192 = vst [vmem:[#allocation5] sm:$0xff] %v176
    %193 = vst [vmem:[#allocation5 + $0x8] sm:$0xff] %v177
    %194 = vst [vmem:[#allocation5 + $0x10] sm:$0xff] %v178
    %195 = vst [vmem:[#allocation5 + $0x18] sm:$0xff] %v179
    %196 = vst [vmem:[#allocation5 + $0x20] sm:$0xff] %v180
    %197 = vst [vmem:[#allocation5 + $0x28] sm:$0xff] %v181
    %198 = vst [vmem:[#allocation5 + $0x30] sm:$0xff] %v182
    %199 = vst [vmem:[#allocation5 + $0x38] sm:$0xff] %v183
    %200 = vst [vmem:[#allocation5 + $0x40] sm:$0xff] %v184
    %201 = vst [vmem:[#allocation5 + $0x48] sm:$0xff] %v185
    %202 = vst [vmem:[#allocation5 + $0x50] sm:$0xff] %v186
    %203 = vst [vmem:[#allocation5 + $0x58] sm:$0xff] %v187
    %204 = vst [vmem:[#allocation5 + $0x60] sm:$0xff] %v188
    %205 = vst [vmem:[#allocation5 + $0x68] sm:$0xff] %v189
    %206 = vst [vmem:[#allocation5 + $0x70] sm:$0xff] %v190
    %207 = vst [vmem:[#allocation5 + $0x78] sm:$0xff] %v191
    // Predicated region
    $region18: #{tpu_custom_call.1} parent=1 // pred_check
      _
    $region19: #{tpu_custom_call.1} parent=1 // pred_check_branch
      %209 = sbr.rel (0) target = $region21
    $region20: #{tpu_custom_call.1} parent=1 // pred_region
      %s211 = ssub.s32 2048, 2048
      %212 = vsyncadd [#allocation4], %s211
      %s213 = sshll.u32 [#allocation5], 4
      %s214 = int_to_ptr.vmem [resolvable:$true] %s213
      %219 = dma.vmem_to_hbm [thread:$0]  %s214, 2048, %s3, [#allocation4], 128, 128, 8
    $region21: #{tpu_custom_call.1} parent=1 // pred_fallthru
      _
    // Predicated region
    $region22: #{tpu_custom_call.1} parent=1 // pred_check
      _
    $region23: #{tpu_custom_call.1} parent=1 // pred_check_branch
      %221 = sbr.rel (0) target = $region25
    $region24: #{tpu_custom_call.1} parent=1 // pred_region
      %222 = dma.done [#allocation4], 2048
    $region25: #{tpu_custom_call.1} parent=1 // pred_fallthru
      _
    %223 = vsyncpa [#allocation3], 1
    %224 = vsyncpa [#allocation4], 1

</llo_original>
